<compile_context>
chip_gen: v7x
topology: tpu7x:2x2x1
jax: 0.10.0
libtpu: 0.0.40
codegen_flags: <defaults>
</compile_context>

<pallas_src>
import jax
import jax.numpy as jnp
from jax.experimental import pallas as pl
from jax.experimental.pallas import tpu as pltpu

LANE = 128        # TPU lane width: hidden / action dims padded up to this
NEG_PAD = -1e30   # bias for padded logit lanes -> exp underflows to 0 in softmax


def _round_up(n, m):
    return ((n + m - 1) // m) * m


def _pad_to(a, shape):
    return jnp.pad(a, [(0, t - s) for s, t in zip(a.shape, shape)])


def pnet_kernel(x_ref, w1_ref, b1_ref, w2_ref, b2_ref, w3_ref, b3_ref, out_ref):
    x = x_ref[...]                                   # (tb, state_dim) f32
    state_dim = w1_ref.shape[0]
    compute_dtype = w2_ref.dtype                     # bf16 (or f32)

    # ---- layer 1 + ReLU -------------------------------------------------
    b1 = b1_ref[...]                                 # (1, h_pad) f32
    if state_dim <= 8:
        # K is tiny: do it as `state_dim` broadcast-FMAs on the VPU instead of
        # a skinny, lane-sparse MXU matmul.  Padded output lanes stay 0.
        w1 = w1_ref[...].astype(jnp.float32)         # (state_dim, h_pad)
        h1 = b1
        for k in range(state_dim):                   # static trip count
            h1 = h1 + x[:, k:k + 1] * w1[k:k + 1, :]
    else:
        h1 = jnp.dot(x.astype(compute_dtype), w1_ref[...],
                     preferred_element_type=jnp.float32) + b1
    h1 = jnp.maximum(h1, 0.0)

    # ---- layer 2 + ReLU (bf16 MXU, f32 accumulation) --------------------
    h2 = jnp.dot(h1.astype(compute_dtype), w2_ref[...],
                 preferred_element_type=jnp.float32) + b2_ref[...]
    h2 = jnp.maximum(h2, 0.0)

    # ---- output layer + softmax -----------------------------------------
    # Padded action lanes carry a -1e30 bias, so max/exp/sum over the full
    # 128-lane tile reduce to the softmax over the real actions.
    logits = jnp.dot(h2.astype(compute_dtype), w3_ref[...],
                     preferred_element_type=jnp.float32) + b3_ref[...]
    m = jnp.max(logits, axis=-1, keepdims=True)
    e = jnp.exp(logits - m)
    denom = jnp.sum(e, axis=-1, keepdims=True)
    # Exact f32 division: rows sum to 1 to f32 precision (the previous
    # approx-reciprocal version violated the normalization tolerance).
    out_ref[...] = (e / denom).astype(out_ref.dtype)


def prepare_pnet_params(params, *, compute_dtype=jnp.bfloat16):
    """One-time lane padding + dtype cast of PNet parameters (hoisted out of
    the per-call forward).  Weights are stored [in, out] (pre-transposed)."""
    w1, b1, w2, b2, w3, b3 = (params["w1"], params["b1"], params["w2"],
                              params["b2"], params["w3"], params["b3"])
    state_dim, num_hidden = w1.shape
    num_actions = w3.shape[1]
    h_pad = _round_up(num_hidden, LANE)
    a_pad = _round_up(num_actions, LANE)

    prepared = {
        "w1": _pad_to(w1, (state_dim, h_pad)).astype(compute_dtype),
        "b1": _pad_to(b1.reshape(1, -1), (1, h_pad)).astype(jnp.float32),
        "w2": _pad_to(w2, (h_pad, h_pad)).astype(compute_dtype),
        "b2": _pad_to(b2.reshape(1, -1), (1, h_pad)).astype(jnp.float32),
        "w3": _pad_to(w3, (h_pad, a_pad)).astype(compute_dtype),
        # Zero-weight padded logit lanes get a -1e30 bias -> softmax ignores them.
        "b3": jnp.concatenate(
            [b3.reshape(1, -1).astype(jnp.float32),
             jnp.full((1, a_pad - num_actions), NEG_PAD, jnp.float32)], axis=-1),
        "state_dim": state_dim,
        "num_actions": num_actions,
        "h_pad": h_pad,
        "a_pad": a_pad,
    }
    return prepared


def pnet_forward(x, prepared, *, tile_b=4096):
    """x: [batch, state_dim] float32.  prepared: output of prepare_pnet_params."""
    batch, state_dim = x.shape
    assert state_dim == prepared["state_dim"]
    num_actions = prepared["num_actions"]
    h_pad, a_pad = prepared["h_pad"], prepared["a_pad"]

    # Batch tile: as big as practical (amortizes the ~0.35us/step grid
    # overhead) but capped at ceil(batch/2), sublane-rounded, so a v7x
    # megacore can put at least one tile on each TensorCore.
    tb = max(8, min(_round_up(tile_b, 8), _round_up((batch + 1) // 2, 8)))
    grid_b = pl.cdiv(batch, tb)
    batch_pad = grid_b * tb
    # Only pad x when the tile does not divide the batch (the common
    # large-batch case needs no extra HBM pass).  Padded rows are inert:
    # rows are independent and get sliced off below.
    xk = x if batch_pad == batch else _pad_to(x, (batch_pad, state_dim))

    # VMEM budget: double-buffered x & out tiles + resident weights +
    # in-kernel temporaries, clamped to a v7x-safe 48 MiB ceiling
    # (v5e/v6e have 128 MiB and could go higher if tile_b is raised further).
    w_bytes = sum(int(prepared[k].size) * prepared[k].dtype.itemsize
                  for k in ("w1", "b1", "w2", "b2", "w3", "b3"))
    tile_bytes = (2 * tb * state_dim * 4      # x tile (f32), double-buffered
                  + 2 * tb * a_pad * 4        # out tile (f32), double-buffered
                  + 4 * tb * h_pad * 4)       # h1 / h2 / logits / e temporaries
    vmem_limit = int(min(max(32 * 1024 * 1024, 2 * w_bytes + 2 * tile_bytes),
                         48 * 1024 * 1024))

    const = lambda i: (0, 0)   # weights/biases: VMEM-resident, DMA'd once

    out = pl.pallas_call(
        pnet_kernel,
        out_shape=jax.ShapeDtypeStruct((batch_pad, a_pad), jnp.float32),
        grid=(grid_b,),
        in_specs=[
            pl.BlockSpec((tb, state_dim), lambda i: (i, 0)),   # x tile, pipelined
            pl.BlockSpec((state_dim, h_pad), const),           # w1
            pl.BlockSpec((1, h_pad), const),                   # b1
            pl.BlockSpec((h_pad, h_pad), const),               # w2
            pl.BlockSpec((1, h_pad), const),                   # b2
            pl.BlockSpec((h_pad, a_pad), const),               # w3
            pl.BlockSpec((1, a_pad), const),                   # b3
        ],
        out_specs=pl.BlockSpec((tb, a_pad), lambda i: (i, 0)),
        compiler_params=pltpu.CompilerParams(
            dimension_semantics=("parallel",),   # shard batch tiles across TCs
            vmem_limit_bytes=vmem_limit,
        ),
    )(xk, prepared["w1"], prepared["b1"], prepared["w2"], prepared["b2"],
      prepared["w3"], prepared["b3"])

    # Strip batch padding and padded action lanes.  Callers that can consume
    # the lane-padded [batch_pad, a_pad] layout directly may skip this slice
    # to avoid the strided 8-of-128-lane re-read.
    return out[:batch, :num_actions]


def init_pnet_params(key, state_dim, num_actions, num_hidden=32):
    """Deterministic init matching nn.Linear's U(-1/sqrt(fan_in), +).  Weights
    stored as [in, out] (pre-transposed vs PyTorch's [out, in])."""
    k1, k2, k3, k4, k5, k6 = jax.random.split(key, 6)

    def u(k, shape, fan_in):
        bound = 1.0 / jnp.sqrt(fan_in)
        return jax.random.uniform(k, shape, jnp.float32, -bound, bound)

    return {
        "w1": u(k1, (state_dim, num_hidden), state_dim),
        "b1": u(k2, (num_hidden,), state_dim),
        "w2": u(k3, (num_hidden, num_hidden), num_hidden),
        "b2": u(k4, (num_hidden,), num_hidden),
        "w3": u(k5, (num_hidden, num_actions), num_hidden),
        "b3": u(k6, (num_actions,), num_hidden),
    }


def pnet_reference(x, params):
    """Pure-JAX (f32) reference of the PyTorch forward, for sanity checking."""
    h1 = jnp.maximum(x @ params["w1"] + params["b1"], 0.0)
    h2 = jnp.maximum(h1 @ params["w2"] + params["b2"], 0.0)
    logits = h2 @ params["w3"] + params["b3"]
    return jax.nn.softmax(logits, axis=-1)


if __name__ == "__main__":
    key = jax.random.PRNGKey(0)
    k_param, k_x = jax.random.split(key)

    state_dim = 4      # e.g. CartPole-style observation
    num_actions = 8
    batch = 2          # NOTE: at this toy batch, wall time is pure launch/DMA
                       # overhead; the tiling wins show up at batch >= ~512.

    params = init_pnet_params(k_param, state_dim, num_actions)
    prepared = prepare_pnet_params(params)   # pad + cast once, not per call
    x = jax.random.normal(k_x, (batch, state_dim), jnp.float32)

    out = jax.block_until_ready(pnet_forward(x, prepared))
    ref = pnet_reference(x, params)

    assert out.shape == (batch, num_actions)
    assert bool(jnp.all(jnp.isfinite(out)))
    # Exact f32 normalization inside the kernel -> rows sum to 1 to f32 eps.
    assert jnp.allclose(jnp.sum(out, axis=-1), 1.0, atol=1e-4)
    # bf16 matmul operands (f32 accumulation) vs the pure-f32 reference.
    assert jnp.allclose(out, ref, atol=5e-3, rtol=5e-3)

    print("KERNEL_OK")
</pallas_src>

<mosaic_0001>
module attributes {stable_mosaic.version = 11 : i64} {
  func.func @pnet_kernel(%arg0: i32, %arg1: memref<8x4xf32, #tpu.memory_space<vmem>>, %arg2: memref<4x128xbf16, #tpu.memory_space<vmem>>, %arg3: memref<1x128xf32, #tpu.memory_space<vmem>>, %arg4: memref<128x128xbf16, #tpu.memory_space<vmem>>, %arg5: memref<1x128xf32, #tpu.memory_space<vmem>>, %arg6: memref<128x128xbf16, #tpu.memory_space<vmem>>, %arg7: memref<1x128xf32, #tpu.memory_space<vmem>>, %arg8: memref<8x128xf32, #tpu.memory_space<vmem>>) attributes {dimension_semantics = [#tpu.dimension_semantics<parallel>], iteration_bounds = array<i64: 1>, scalar_prefetch = 0 : i64, scratch_operands = 0 : i64, tpu.core_type = #tpu.core_type<tc>, window_params = [{transform_indices = @transform_0, window_bounds = array<i64: 8, 4>}, {pipeline_mode = #tpu.pipeline_mode<synchronous>, transform_indices = @transform_1, window_bounds = array<i64: 4, 128>}, {pipeline_mode = #tpu.pipeline_mode<synchronous>, transform_indices = @transform_2, window_bounds = array<i64: 1, 128>}, {pipeline_mode = #tpu.pipeline_mode<synchronous>, transform_indices = @transform_3, window_bounds = array<i64: 128, 128>}, {pipeline_mode = #tpu.pipeline_mode<synchronous>, transform_indices = @transform_4, window_bounds = array<i64: 1, 128>}, {pipeline_mode = #tpu.pipeline_mode<synchronous>, transform_indices = @transform_5, window_bounds = array<i64: 128, 128>}, {pipeline_mode = #tpu.pipeline_mode<synchronous>, transform_indices = @transform_6, window_bounds = array<i64: 1, 128>}, {transform_indices = @transform_7, window_bounds = array<i64: 8, 128>}]} {
    %c0 = arith.constant 0 : index
    %c0_0 = arith.constant 0 : index
    %0 = vector.load %arg1[%c0, %c0_0] : memref<8x4xf32, #tpu.memory_space<vmem>>, vector<8x4xf32>
    %c0_1 = arith.constant 0 : index
    %c0_2 = arith.constant 0 : index
    %1 = vector.load %arg3[%c0_1, %c0_2] : memref<1x128xf32, #tpu.memory_space<vmem>>, vector<1x128xf32>
    %c0_3 = arith.constant 0 : index
    %c0_4 = arith.constant 0 : index
    %2 = vector.load %arg2[%c0_3, %c0_4] : memref<4x128xbf16, #tpu.memory_space<vmem>>, vector<4x128xbf16>
    %3 = arith.extf %2 : vector<4x128xbf16> to vector<4x128xf32>
    %4 = vector.extract_strided_slice %0 {offsets = [0, 0], sizes = [8, 1], strides = [1, 1]} : vector<8x4xf32> to vector<8x1xf32>
    %5 = vector.extract_strided_slice %3 {offsets = [0, 0], sizes = [1, 128], strides = [1, 1]} : vector<4x128xf32> to vector<1x128xf32>
    %6 = vector.broadcast %4 : vector<8x1xf32> to vector<8x128xf32>
    %7 = vector.broadcast %5 : vector<1x128xf32> to vector<8x128xf32>
    %8 = arith.mulf %6, %7 : vector<8x128xf32>
    %9 = vector.broadcast %1 : vector<1x128xf32> to vector<8x128xf32>
    %10 = arith.addf %9, %8 : vector<8x128xf32>
    %11 = vector.extract_strided_slice %0 {offsets = [0, 1], sizes = [8, 1], strides = [1, 1]} : vector<8x4xf32> to vector<8x1xf32>
    %12 = vector.extract_strided_slice %3 {offsets = [1, 0], sizes = [1, 128], strides = [1, 1]} : vector<4x128xf32> to vector<1x128xf32>
    %13 = vector.broadcast %11 : vector<8x1xf32> to vector<8x128xf32>
    %14 = vector.broadcast %12 : vector<1x128xf32> to vector<8x128xf32>
    %15 = arith.mulf %13, %14 : vector<8x128xf32>
    %16 = arith.addf %10, %15 : vector<8x128xf32>
    %17 = vector.extract_strided_slice %0 {offsets = [0, 2], sizes = [8, 1], strides = [1, 1]} : vector<8x4xf32> to vector<8x1xf32>
    %18 = vector.extract_strided_slice %3 {offsets = [2, 0], sizes = [1, 128], strides = [1, 1]} : vector<4x128xf32> to vector<1x128xf32>
    %19 = vector.broadcast %17 : vector<8x1xf32> to vector<8x128xf32>
    %20 = vector.broadcast %18 : vector<1x128xf32> to vector<8x128xf32>
    %21 = arith.mulf %19, %20 : vector<8x128xf32>
    %22 = arith.addf %16, %21 : vector<8x128xf32>
    %23 = vector.extract_strided_slice %0 {offsets = [0, 3], sizes = [8, 1], strides = [1, 1]} : vector<8x4xf32> to vector<8x1xf32>
    %24 = vector.extract_strided_slice %3 {offsets = [3, 0], sizes = [1, 128], strides = [1, 1]} : vector<4x128xf32> to vector<1x128xf32>
    %25 = vector.broadcast %23 : vector<8x1xf32> to vector<8x128xf32>
    %26 = vector.broadcast %24 : vector<1x128xf32> to vector<8x128xf32>
    %27 = arith.mulf %25, %26 : vector<8x128xf32>
    %28 = arith.addf %22, %27 : vector<8x128xf32>
    %cst = arith.constant 0.000000e+00 : f32
    %29 = vector.broadcast %cst : f32 to vector<8x128xf32>
    %30 = arith.maximumf %28, %29 : vector<8x128xf32>
    %31 = arith.truncf %30 : vector<8x128xf32> to vector<8x128xbf16>
    %c0_5 = arith.constant 0 : index
    %c0_6 = arith.constant 0 : index
    %32 = vector.load %arg4[%c0_5, %c0_6] : memref<128x128xbf16, #tpu.memory_space<vmem>>, vector<128x128xbf16>
    %cst_7 = arith.constant dense<0.000000e+00> : vector<8x128xf32>
    %33 = tpu.matmul %31, %32, %cst_7 {dimension_numbers = #tpu.dot_dimension_numbers<[1], [0], [0], [1], [0, 0, 1, 1], [], []>} : vector<8x128xbf16>, vector<128x128xbf16>, vector<8x128xf32> -> vector<8x128xf32>
    %c0_8 = arith.constant 0 : index
    %c0_9 = arith.constant 0 : index
    %34 = vector.load %arg5[%c0_8, %c0_9] : memref<1x128xf32, #tpu.memory_space<vmem>>, vector<1x128xf32>
    %35 = vector.broadcast %34 : vector<1x128xf32> to vector<8x128xf32>
    %36 = arith.addf %33, %35 : vector<8x128xf32>
    %cst_10 = arith.constant 0.000000e+00 : f32
    %37 = vector.broadcast %cst_10 : f32 to vector<8x128xf32>
    %38 = arith.maximumf %36, %37 : vector<8x128xf32>
    %39 = arith.truncf %38 : vector<8x128xf32> to vector<8x128xbf16>
    %c0_11 = arith.constant 0 : index
    %c0_12 = arith.constant 0 : index
    %40 = vector.load %arg6[%c0_11, %c0_12] : memref<128x128xbf16, #tpu.memory_space<vmem>>, vector<128x128xbf16>
    %cst_13 = arith.constant dense<0.000000e+00> : vector<8x128xf32>
    %41 = tpu.matmul %39, %40, %cst_13 {dimension_numbers = #tpu.dot_dimension_numbers<[1], [0], [0], [1], [0, 0, 1, 1], [], []>} : vector<8x128xbf16>, vector<128x128xbf16>, vector<8x128xf32> -> vector<8x128xf32>
    %c0_14 = arith.constant 0 : index
    %c0_15 = arith.constant 0 : index
    %42 = vector.load %arg7[%c0_14, %c0_15] : memref<1x128xf32, #tpu.memory_space<vmem>>, vector<1x128xf32>
    %43 = vector.broadcast %42 : vector<1x128xf32> to vector<8x128xf32>
    %44 = arith.addf %41, %43 : vector<8x128xf32>
    %cst_16 = arith.constant dense<0xFF800000> : vector<8xf32>
    %45 = vector.multi_reduction <maximumf>, %44, %cst_16 [1] : vector<8x128xf32> to vector<8xf32>
    %46 = vector.shape_cast %45 : vector<8xf32> to vector<8x1xf32>
    %47 = vector.broadcast %46 : vector<8x1xf32> to vector<8x128xf32>
    %48 = arith.subf %44, %47 : vector<8x128xf32>
    %49 = math.exp %48 : vector<8x128xf32>
    %cst_17 = arith.constant dense<0.000000e+00> : vector<8xf32>
    %50 = vector.multi_reduction <add>, %49, %cst_17 [1] : vector<8x128xf32> to vector<8xf32>
    %51 = vector.shape_cast %50 : vector<8xf32> to vector<8x1xf32>
    %52 = vector.broadcast %51 : vector<8x1xf32> to vector<8x128xf32>
    %53 = arith.divf %49, %52 : vector<8x128xf32>
    %c0_18 = arith.constant 0 : index
    %c0_19 = arith.constant 0 : index
    %54 = vector.load %arg8[%c0_18, %c0_19] : memref<8x128xf32, #tpu.memory_space<vmem>>, vector<8x128xf32>
    tpu.vector_store %arg8[%c0_18, %c0_19], %53 {strides = array<i32>} : memref<8x128xf32, #tpu.memory_space<vmem>>, vector<8x128xf32>,
    return
  }
  func.func @transform_0(%arg0: i32) -> (i32, i32) {
    %c0_i32 = arith.constant 0 : i32
    %c0_i32_0 = arith.constant 0 : i32
    return %arg0, %c0_i32 : i32, i32
  }
  func.func @transform_1(%arg0: i32) -> (i32, i32) {
    %c0_i32 = arith.constant 0 : i32
    %c0_i32_0 = arith.constant 0 : i32
    %c0_i32_1 = arith.constant 0 : i32
    return %c0_i32, %c0_i32_0 : i32, i32
  }
  func.func @transform_2(%arg0: i32) -> (i32, i32) {
    %c0_i32 = arith.constant 0 : i32
    %c0_i32_0 = arith.constant 0 : i32
    %c0_i32_1 = arith.constant 0 : i32
    return %c0_i32, %c0_i32_0 : i32, i32
  }
  func.func @transform_3(%arg0: i32) -> (i32, i32) {
    %c0_i32 = arith.constant 0 : i32
    %c0_i32_0 = arith.constant 0 : i32
    %c0_i32_1 = arith.constant 0 : i32
    return %c0_i32, %c0_i32_0 : i32, i32
  }
  func.func @transform_4(%arg0: i32) -> (i32, i32) {
    %c0_i32 = arith.constant 0 : i32
    %c0_i32_0 = arith.constant 0 : i32
    %c0_i32_1 = arith.constant 0 : i32
    return %c0_i32, %c0_i32_0 : i32, i32
  }
  func.func @transform_5(%arg0: i32) -> (i32, i32) {
    %c0_i32 = arith.constant 0 : i32
    %c0_i32_0 = arith.constant 0 : i32
    %c0_i32_1 = arith.constant 0 : i32
    return %c0_i32, %c0_i32_0 : i32, i32
  }
  func.func @transform_6(%arg0: i32) -> (i32, i32) {
    %c0_i32 = arith.constant 0 : i32
    %c0_i32_0 = arith.constant 0 : i32
    %c0_i32_1 = arith.constant 0 : i32
    return %c0_i32, %c0_i32_0 : i32, i32
  }
  func.func @transform_7(%arg0: i32) -> (i32, i32) {
    %c0_i32 = arith.constant 0 : i32
    %c0_i32_0 = arith.constant 0 : i32
    return %arg0, %c0_i32 : i32, i32
  }
}

</mosaic_0001>

<llo_original>
// kernel: tpu_custom_call.1
$region0: #{tpu_custom_call.1}
  #allocation0 [shape = 'u32[]', space=smem, size = 0x4, offset = 0x4, fixed_abs, tag = 'smem constant byte address 0x4 - core index']
  #allocation1 [shape = 'u32[144,128]{1,0:T(1,128)}', space=vmem, size = 0x12000, scoped, tag = 'internal scratch']
  %s0 = inlined_call_operand.vmem [shape: f32[8,4], index: 0, kind: input, shape index: {}]
  %s1 = inlined_call_operand.vmem [shape: bf16[4,128], index: 1, kind: input, shape index: {}]
  %s2 = inlined_call_operand.vmem [shape: f32[1,128], index: 2, kind: input, shape index: {}]
  %s3 = inlined_call_operand.hbm [shape: bf16[128,128], index: 3, kind: input, shape index: {}]
  %s4 = inlined_call_operand.vmem [shape: f32[1,128], index: 4, kind: input, shape index: {}]
  %s5 = inlined_call_operand.hbm [shape: bf16[128,128], index: 5, kind: input, shape index: {}]
  %s6 = inlined_call_operand.vmem [shape: f32[1,128], index: 6, kind: input, shape index: {}]
  %s7 = inlined_call_operand.hbm [shape: f32[8,128], index: 7, kind: output, shape index: {}]
  %s8 = sld [smem:[#allocation0]]
  $region46: #{tpu_custom_call.1} parent=0
    _
  %s10 = ssub.s32 1, %s8
  %s11 = scalar_select 0, %s10, %s8
  $region1: #{tpu_custom_call.1} parent=0
    #allocation2 [shape = 'u8[32768]{0}', space=vmem, size = 0x8000, scoped, tag = 'input window, operand 3, single buffered']
    #allocation3 [shape = 's32[1]{0}', space=sflag, size = 0x4, scoped, tag = 'scoped memory for tpu_custom_call.1']
    #allocation4 [shape = 's32[1]{0}', space=sflag, size = 0x4, scoped, tag = 'scoped memory for tpu_custom_call.1']
    #allocation5 [shape = 'u8[32768]{0}', space=vmem, size = 0x8000, scoped, tag = 'input window, operand 5, single buffered']
    #allocation6 [shape = 's32[1]{0}', space=sflag, size = 0x4, scoped, tag = 'scoped memory for tpu_custom_call.1']
    #allocation7 [shape = 'u8[4096]{0}', space=vmem, size = 0x1000, scoped, tag = 'output window, operand 0, single buffered']
    %12 = vsyncpa [#allocation3], 0
    %13 = vsyncpa [#allocation6], 0
    %14 = vsyncpa [#allocation4], 0
    // Predicated region
    $region2: #{tpu_custom_call.1} parent=1 // pred_check
      _
    $region3: #{tpu_custom_call.1} parent=1 // pred_check_branch
      %16 = sbr.rel (0) target = $region5
    $region4: #{tpu_custom_call.1} parent=1 // pred_region
      _
    $region5: #{tpu_custom_call.1} parent=1 // pred_fallthru
      _
    // Predicated region
    $region6: #{tpu_custom_call.1} parent=1 // pred_check
      _
    $region7: #{tpu_custom_call.1} parent=1 // pred_check_branch
      %18 = sbr.rel (0) target = $region9
    $region8: #{tpu_custom_call.1} parent=1 // pred_region
      _
    $region9: #{tpu_custom_call.1} parent=1 // pred_fallthru
      _
    // Predicated region
    $region10: #{tpu_custom_call.1} parent=1 // pred_check
      _
    $region11: #{tpu_custom_call.1} parent=1 // pred_check_branch
      %20 = sbr.rel (0) target = $region13
    $region12: #{tpu_custom_call.1} parent=1 // pred_region
      _
    $region13: #{tpu_custom_call.1} parent=1 // pred_fallthru
      _
    // Predicated region
    $region14: #{tpu_custom_call.1} parent=1 // pred_check
      _
    $region15: #{tpu_custom_call.1} parent=1 // pred_check_branch
      %22 = sbr.rel (0) target = $region17
    $region16: #{tpu_custom_call.1} parent=1 // pred_region
      %s24 = ssub.s32 1024, 1024
      %25 = vsyncadd [#allocation3], %s24
      %s26 = sshll.u32 [#allocation2], 4
      %s27 = int_to_ptr.vmem [resolvable:$true] %s26
      %32 = dma.hbm_to_vmem [thread:$0]  %s3, 1024, %s27, [#allocation3], 64, 64, 4
    $region17: #{tpu_custom_call.1} parent=1 // pred_fallthru
      _
    // Predicated region
    $region18: #{tpu_custom_call.1} parent=1 // pred_check
      _
    $region19: #{tpu_custom_call.1} parent=1 // pred_check_branch
      %34 = sbr.rel (0) target = $region21
    $region20: #{tpu_custom_call.1} parent=1 // pred_region
      _
    $region21: #{tpu_custom_call.1} parent=1 // pred_fallthru
      _
    // Predicated region
    $region22: #{tpu_custom_call.1} parent=1 // pred_check
      _
    $region23: #{tpu_custom_call.1} parent=1 // pred_check_branch
      %36 = sbr.rel (0) target = $region25
    $region24: #{tpu_custom_call.1} parent=1 // pred_region
      %s38 = ssub.s32 1024, 1024
      %39 = vsyncadd [#allocation6], %s38
      %s40 = sshll.u32 [#allocation5], 4
      %s41 = int_to_ptr.vmem [resolvable:$true] %s40
      %46 = dma.hbm_to_vmem [thread:$0]  %s5, 1024, %s41, [#allocation6], 64, 64, 4
    $region25: #{tpu_custom_call.1} parent=1 // pred_fallthru
      _
    // Predicated region
    $region26: #{tpu_custom_call.1} parent=1 // pred_check
      _
    $region27: #{tpu_custom_call.1} parent=1 // pred_check_branch
      %48 = sbr.rel (0) target = $region29
    $region28: #{tpu_custom_call.1} parent=1 // pred_region
      _
    $region29: #{tpu_custom_call.1} parent=1 // pred_fallthru
      _
    // Predicated region
    $region30: #{tpu_custom_call.1} parent=1 // pred_check
      _
    $region31: #{tpu_custom_call.1} parent=1 // pred_check_branch
      %50 = sbr.rel (0) target = $region33
    $region32: #{tpu_custom_call.1} parent=1 // pred_region
      %51 = dma.done [#allocation3], 1024
    $region33: #{tpu_custom_call.1} parent=1 // pred_fallthru
      _
    // Predicated region
    $region34: #{tpu_custom_call.1} parent=1 // pred_check
      _
    $region35: #{tpu_custom_call.1} parent=1 // pred_check_branch
      %53 = sbr.rel (0) target = $region37
    $region36: #{tpu_custom_call.1} parent=1 // pred_region
      %54 = dma.done [#allocation6], 1024
    $region37: #{tpu_custom_call.1} parent=1 // pred_fallthru
      _
    %v56 = vld [vmem:[%s0] sm:$0xff]
    %v57 = vld [vmem:[%s2] sm:$0x1]
    %v58 = vld [vmem:[%s1] sm:$0x3]
    %v59 = vunpack.c.l.bf16 %v58
    %61 = vset.pattern.permute.xlu0 0
    %62 = vperm.xlu0 %61, %v56
    %v63 = vpop.permute.xlu0 %62
    %v65 = vlaneseq
    %v66 = vshrl.u32 %v65, 7
    %v67 = vsub.s32 0, %v66
    %v68 = vrot.slane %v59, %v67
    %v69 = vmul.f32 %v63, %v68
    %v71 = vlaneseq
    %v72 = vshrl.u32 %v71, 7
    %v73 = vsub.s32 0, %v72
    %v74 = vrot.slane %v57, %v73
    %v76 = vadd.f32 %v74, %v69
    %77 = vset.pattern.permute.xlu0 1
    %78 = vperm.xlu0 %77, %v56
    %v79 = vpop.permute.xlu0 %78
    %v81 = vlaneseq
    %v82 = vshrl.u32 %v81, 7
    %v83 = vsub.s32 1, %v82
    %v84 = vrot.slane %v59, %v83
    %v85 = vmul.f32 %v79, %v84
    %v86 = vadd.f32 %v76, %v85
    %87 = vset.pattern.permute.xlu0 2
    %88 = vperm.xlu0 %87, %v56
    %v89 = vpop.permute.xlu0 %88
    %v91 = vlaneseq
    %v92 = vshrl.u32 %v91, 7
    %v93 = vsub.s32 2, %v92
    %v94 = vrot.slane %v59, %v93
    %v95 = vmul.f32 %v89, %v94
    %v96 = vadd.f32 %v86, %v95
    %97 = vset.pattern.permute.xlu0 3
    %98 = vperm.xlu0 %97, %v56
    %v99 = vpop.permute.xlu0 %98
    %v101 = vlaneseq
    %v102 = vshrl.u32 %v101, 7
    %v103 = vsub.s32 3, %v102
    %v104 = vrot.slane %v59, %v103
    %v105 = vmul.f32 %v99, %v104
    %v106 = vadd.f32 %v96, %v105
    %v107 = vmax.f32 %v106, 0.0
    %v108 = vpack.c.bf16 %v107, %v107
    %v109 = vld [vmem:[#allocation2] sm:$0xf]
    %v110 = vld [vmem:[#allocation2 + $0x4] sm:$0xf]
    %v111 = vld [vmem:[#allocation2 + $0x8] sm:$0xf]
    %v112 = vld [vmem:[#allocation2 + $0xc] sm:$0xf]
    %v113 = vld [vmem:[#allocation2 + $0x10] sm:$0xf]
    %v114 = vld [vmem:[#allocation2 + $0x14] sm:$0xf]
    %v115 = vld [vmem:[#allocation2 + $0x18] sm:$0xf]
    %v116 = vld [vmem:[#allocation2 + $0x1c] sm:$0xf]
    %v117 = vld [vmem:[#allocation2 + $0x20] sm:$0xf]
    %v118 = vld [vmem:[#allocation2 + $0x24] sm:$0xf]
    %v119 = vld [vmem:[#allocation2 + $0x28] sm:$0xf]
    %v120 = vld [vmem:[#allocation2 + $0x2c] sm:$0xf]
    %v121 = vld [vmem:[#allocation2 + $0x30] sm:$0xf]
    %v122 = vld [vmem:[#allocation2 + $0x34] sm:$0xf]
    %v123 = vld [vmem:[#allocation2 + $0x38] sm:$0xf]
    %v124 = vld [vmem:[#allocation2 + $0x3c] sm:$0xf]
    %v125 = vld [vmem:[%s4] sm:$0x1]
    %v127 = vlaneseq
    %v128 = vshrl.u32 %v127, 7
    %v129 = vsub.s32 0, %v128
    %v130 = vrot.slane %v125, %v129
    %v148 = vunpack.c.l.b16 %v109
    %v149 = vunpack.c.l.b16 %v110
    %v150 = vunpack.c.l.b16 %v111
    %v151 = vunpack.c.l.b16 %v112
    %v152 = vunpack.c.l.b16 %v113
    %v153 = vunpack.c.l.b16 %v114
    %v154 = vunpack.c.l.b16 %v115
    %v155 = vunpack.c.l.b16 %v116
    %v156 = vunpack.c.l.b16 %v117
    %v157 = vunpack.c.l.b16 %v118
    %v158 = vunpack.c.l.b16 %v119
    %v159 = vunpack.c.l.b16 %v120
    %v160 = vunpack.c.l.b16 %v121
    %v161 = vunpack.c.l.b16 %v122
    %v162 = vunpack.c.l.b16 %v123
    %v163 = vunpack.c.l.b16 %v124
    %v164 = vpack.c.b16 %v149, %v148
    %v165 = vpack.c.b16 %v151, %v150
    %v166 = vpack.c.b16 %v153, %v152
    %v167 = vpack.c.b16 %v155, %v154
    %v168 = vpack.c.b16 %v157, %v156
    %v169 = vpack.c.b16 %v159, %v158
    %v170 = vpack.c.b16 %v161, %v160
    %v171 = vpack.c.b16 %v163, %v162
    %180 = vmatprep.subr.bf16.mxu0 0
    %181 = vmatpush1.bf16.msra.mxu0 %v164
    %182 = vmatprep.subr.bf16.mxu0 0
    %183 = vmatpush1.bf16.msra.mxu0 %v165
    %184 = vmatprep.subr.bf16.mxu0 0
    %185 = vmatpush1.bf16.msra.mxu0 %v166
    %186 = vmatprep.subr.bf16.mxu0 0
    %187 = vmatpush1.bf16.msra.mxu0 %v167
    %188 = vmatprep.subr.bf16.mxu0 0
    %189 = vmatpush1.bf16.msra.mxu0 %v168
    %190 = vmatprep.subr.bf16.mxu0 0
    %191 = vmatpush1.bf16.msra.mxu0 %v169
    %192 = vmatprep.subr.bf16.mxu0 0
    %193 = vmatpush1.bf16.msra.mxu0 %v170
    %194 = vmatprep.subr.bf16.mxu0 0
    %195 = vmatpush1.bf16.msra.mxu0 %v171
    %196 = vmatprep.subr.bf16.mxu0 0
    %197 = vmatpush1.bf16.msra.mxu0 0
    %198 = vmatprep.subr.bf16.mxu0 0
    %199 = vmatpush1.bf16.msra.mxu0 0
    %200 = vmatprep.subr.bf16.mxu0 0
    %201 = vmatpush1.bf16.msra.mxu0 0
    %202 = vmatprep.subr.bf16.mxu0 0
    %203 = vmatpush1.bf16.msra.mxu0 0
    %204 = vmatprep.subr.bf16.mxu0 0
    %205 = vmatpush1.bf16.msra.mxu0 0
    %206 = vmatprep.subr.bf16.mxu0 0
    %207 = vmatpush1.bf16.msra.mxu0 0
    %208 = vmatprep.subr.bf16.mxu0 0
    %209 = vmatpush1.bf16.msra.mxu0 0
    %210 = vmatprep.subr.bf16.mxu0 0
    %211 = vmatpush1.bf16.msra.mxu0 0
    %212 = vmatprep.mubr.bf16.mxu0 0
    %213 = vmatmul.mubr.bf16.gmra.mrb[0].mxu0 %v108
    %v214 = vpop.f32.mrb[0].mxu0
    %v215 = vadd.f32 %v130, %v214
    %v216 = vpop.f32.mrb[0].mxu0
    %v217 = vpop.f32.mrb[0].mxu0
    %v218 = vpop.f32.mrb[0].mxu0
    %219 = vdwg.mxu0
    %v220 = vmax.f32 %v215, 0.0
    %v221 = vpack.c.bf16 %v220, %v220
    %v222 = vld [vmem:[#allocation5] sm:$0xf]
    %v223 = vld [vmem:[#allocation5 + $0x4] sm:$0xf]
    %v224 = vld [vmem:[#allocation5 + $0x8] sm:$0xf]
    %v225 = vld [vmem:[#allocation5 + $0xc] sm:$0xf]
    %v226 = vld [vmem:[#allocation5 + $0x10] sm:$0xf]
    %v227 = vld [vmem:[#allocation5 + $0x14] sm:$0xf]
    %v228 = vld [vmem:[#allocation5 + $0x18] sm:$0xf]
    %v229 = vld [vmem:[#allocation5 + $0x1c] sm:$0xf]
    %v230 = vld [vmem:[#allocation5 + $0x20] sm:$0xf]
    %v231 = vld [vmem:[#allocation5 + $0x24] sm:$0xf]
    %v232 = vld [vmem:[#allocation5 + $0x28] sm:$0xf]
    %v233 = vld [vmem:[#allocation5 + $0x2c] sm:$0xf]
    %v234 = vld [vmem:[#allocation5 + $0x30] sm:$0xf]
    %v235 = vld [vmem:[#allocation5 + $0x34] sm:$0xf]
    %v236 = vld [vmem:[#allocation5 + $0x38] sm:$0xf]
    %v237 = vld [vmem:[#allocation5 + $0x3c] sm:$0xf]
    %v238 = vld [vmem:[%s6] sm:$0x1]
    %v240 = vlaneseq
    %v241 = vshrl.u32 %v240, 7
    %v242 = vsub.s32 0, %v241
    %v243 = vrot.slane %v238, %v242
    %v261 = vunpack.c.l.b16 %v222
    %v262 = vunpack.c.l.b16 %v223
    %v263 = vunpack.c.l.b16 %v224
    %v264 = vunpack.c.l.b16 %v225
    %v265 = vunpack.c.l.b16 %v226
    %v266 = vunpack.c.l.b16 %v227
    %v267 = vunpack.c.l.b16 %v228
    %v268 = vunpack.c.l.b16 %v229
    %v269 = vunpack.c.l.b16 %v230
    %v270 = vunpack.c.l.b16 %v231
    %v271 = vunpack.c.l.b16 %v232
    %v272 = vunpack.c.l.b16 %v233
    %v273 = vunpack.c.l.b16 %v234
    %v274 = vunpack.c.l.b16 %v235
    %v275 = vunpack.c.l.b16 %v236
    %v276 = vunpack.c.l.b16 %v237
    %v277 = vpack.c.b16 %v262, %v261
    %v278 = vpack.c.b16 %v264, %v263
    %v279 = vpack.c.b16 %v266, %v265
    %v280 = vpack.c.b16 %v268, %v267
    %v281 = vpack.c.b16 %v270, %v269
    %v282 = vpack.c.b16 %v272, %v271
    %v283 = vpack.c.b16 %v274, %v273
    %v284 = vpack.c.b16 %v276, %v275
    %293 = vmatprep.subr.bf16.mxu0 0
    %294 = vmatpush1.bf16.msra.mxu0 %v277
    %295 = vmatprep.subr.bf16.mxu0 0
    %296 = vmatpush1.bf16.msra.mxu0 %v278
    %297 = vmatprep.subr.bf16.mxu0 0
    %298 = vmatpush1.bf16.msra.mxu0 %v279
    %299 = vmatprep.subr.bf16.mxu0 0
    %300 = vmatpush1.bf16.msra.mxu0 %v280
    %301 = vmatprep.subr.bf16.mxu0 0
    %302 = vmatpush1.bf16.msra.mxu0 %v281
    %303 = vmatprep.subr.bf16.mxu0 0
    %304 = vmatpush1.bf16.msra.mxu0 %v282
    %305 = vmatprep.subr.bf16.mxu0 0
    %306 = vmatpush1.bf16.msra.mxu0 %v283
    %307 = vmatprep.subr.bf16.mxu0 0
    %308 = vmatpush1.bf16.msra.mxu0 %v284
    %309 = vmatprep.subr.bf16.mxu0 0
    %310 = vmatpush1.bf16.msra.mxu0 0
    %311 = vmatprep.subr.bf16.mxu0 0
    %312 = vmatpush1.bf16.msra.mxu0 0
    %313 = vmatprep.subr.bf16.mxu0 0
    %314 = vmatpush1.bf16.msra.mxu0 0
    %315 = vmatprep.subr.bf16.mxu0 0
    %316 = vmatpush1.bf16.msra.mxu0 0
    %317 = vmatprep.subr.bf16.mxu0 0
    %318 = vmatpush1.bf16.msra.mxu0 0
    %319 = vmatprep.subr.bf16.mxu0 0
    %320 = vmatpush1.bf16.msra.mxu0 0
    %321 = vmatprep.subr.bf16.mxu0 0
    %322 = vmatpush1.bf16.msra.mxu0 0
    %323 = vmatprep.subr.bf16.mxu0 0
    %324 = vmatpush1.bf16.msra.mxu0 0
    %325 = vmatprep.mubr.bf16.mxu0 0
    %326 = vmatmul.mubr.bf16.gmra.mrb[0].mxu0 %v221
    %v327 = vpop.f32.mrb[0].mxu0
    %v328 = vadd.f32 %v243, %v327
    %v329 = vpop.f32.mrb[0].mxu0
    %v330 = vpop.f32.mrb[0].mxu0
    %v331 = vpop.f32.mrb[0].mxu0
    %332 = vdwg.mxu0
    %333 = vmax.xlane.f32.xlu0 %v328
    %v334 = vpop.xlane.xlu0 %333
    %v335 = vsub.f32 %v328, %v334
    %v336 = vmul.f32 %v335, 1.442695
    %v337 = vpow.pop %v336
    %338 = vadd.xlane.f32.xlu0 %v337
    %v339 = vpop.xlane.xlu0 %338
    %v340 = vrcp.pop %v339
    %v341 = vmul.f32 %v337, %v340
    %342 = vst [vmem:[#allocation7] sm:$0xff] %v341
    // Predicated region
    $region38: #{tpu_custom_call.1} parent=1 // pred_check
      _
    $region39: #{tpu_custom_call.1} parent=1 // pred_check_branch
      %344 = sbr.rel (0) target = $region41
    $region40: #{tpu_custom_call.1} parent=1 // pred_region
      %s346 = ssub.s32 128, 128
      %347 = vsyncadd [#allocation4], %s346
      %s349 = sshll.u32 [#allocation7], 4
      %s350 = int_to_ptr.vmem [resolvable:$true] %s349
      %352 = dma.vmem_to_hbm [thread:$0]  %s350, 128, %s7, [#allocation4]
    $region41: #{tpu_custom_call.1} parent=1 // pred_fallthru
      _
    // Predicated region
    $region42: #{tpu_custom_call.1} parent=1 // pred_check
      _
    $region43: #{tpu_custom_call.1} parent=1 // pred_check_branch
      %354 = sbr.rel (0) target = $region45
    $region44: #{tpu_custom_call.1} parent=1 // pred_region
      %355 = dma.done [#allocation4], 128
    $region45: #{tpu_custom_call.1} parent=1 // pred_fallthru
      _
    %356 = vsyncpa [#allocation3], 1
    %357 = vsyncpa [#allocation6], 1
    %358 = vsyncpa [#allocation4], 1

</llo_original>
